<compile_context>
chip_gen: v5e
topology: v5e:2x2
jax: 0.10.0
libtpu: 0.0.40
codegen_flags: <defaults>
</compile_context>

<pallas_src>
import functools
import math

import jax
import jax.numpy as jnp
from jax.experimental import pallas as pl
from jax.experimental.pallas import tpu as pltpu

_MIB = 1024 * 1024


def _round_up(x: int, m: int) -> int:
    return ((x + m - 1) // m) * m


def _device_kind() -> str:
    try:
        return jax.devices()[0].device_kind.lower()
    except Exception:
        return ""


def _vmem_budget_and_limit():
    """(tile-selection budget, vmem_limit_bytes) per TPU generation."""
    kind = _device_kind()
    if "v7" in kind:          # 64 MiB physical VMEM per TensorCore
        return 20 * _MIB, 40 * _MIB
    if "v6" in kind:          # 128 MiB physical, 32 MiB scoped default
        return 40 * _MIB, 64 * _MIB
    if "v5" in kind:          # 128 MiB physical, 16 MiB scoped default -> raise it
        return 32 * _MIB, 64 * _MIB
    return 12 * _MIB, 32 * _MIB


def _default_hidden_dtype(compute_dtype):
    """Dtype for the hidden layers' bias-add + ReLU chain."""
    if jnp.dtype(compute_dtype) != jnp.dtype(jnp.bfloat16):
        return jnp.float32
    if "v5" in _device_kind():   # v5e has no bf16 VALU; keep elementwise in f32
        return jnp.float32
    return jnp.bfloat16


def _mlp_kernel(*refs, num_hidden: int, precision):
    """Fused MLP kernel.

    refs = (x_ref,
            w_0, b_0, ..., w_{L-1}, b_{L-1},   # L = num_hidden + 1
            out_ref)
    Hidden layers apply ReLU; the final layer is linear (last_linear=True).
    Dropout is identity at inference time and therefore omitted.
    """
    x_ref = refs[0]
    out_ref = refs[-1]
    param_refs = refs[1:-1]

    h = x_ref[...]
    for li in range(num_hidden + 1):
        w = param_refs[2 * li][...]
        b = param_refs[2 * li + 1][...]
        # MXU ingests LHS/RHS in the weight dtype (bf16 by default); f32 accumulate.
        acc = jnp.dot(h.astype(w.dtype), w,
                      preferred_element_type=jnp.float32,
                      precision=precision)
        if li < num_hidden:
            # Hidden layer: bias add + ReLU in the bias dtype chosen by the
            # wrapper (bf16 on v6e/v7x, f32 on v5e).
            h = jnp.maximum(acc.astype(b.dtype) + b, 0)
        else:
            # Final layer: f32 bias add, downcast only on the store (no padding,
            # only the real out_size columns are written).
            out_ref[...] = (acc + b.astype(jnp.float32)).astype(out_ref.dtype)


def _pick_tile_m(in_size, out_size, weights, biases, x_itemsize, out_itemsize,
                 vmem_budget_bytes):
    """Largest row tile (<=4096, multiple of 8) under the VMEM budget.

    Accounts for the resident weights/biases at 2 buffers each (the pipeline
    double-buffers them even with a constant index_map), the double-buffered
    x / out tiles, and the live f32 intermediates.
    """
    lane = lambda n: _round_up(n, 128)
    sub = lambda n: _round_up(n, 8)
    param_bytes = 2 * sum(
        sub(w.shape[0]) * lane(w.shape[1]) * w.dtype.itemsize
        + sub(b.shape[0]) * lane(b.shape[1]) * b.dtype.itemsize
        for w, b in zip(weights, biases))
    max_w = max([lane(in_size)] + [lane(w.shape[1]) for w in weights])

    tile = 4096
    while tile > 8:
        need = (param_bytes
                + 2 * tile * lane(in_size) * x_itemsize     # x, double-buffered
                + 2 * tile * lane(out_size) * out_itemsize  # out, double-buffered
                + 3 * tile * max_w * 4)                     # f32 intermediates + slack
        if need <= vmem_budget_bytes:
            break
        tile //= 2
    return max(8, tile)


def mlp_forward(x, weights, biases, *, tile_m=None, compute_dtype=jnp.bfloat16,
                out_dtype=None, precision=None):
    """Apply the MLP to x of shape (..., in_size).

    weights: list of (fan_in_i, fan_out_i) arrays (already transposed vs torch).
    biases:  list of (1, fan_out_i) arrays.
    compute_dtype: MXU ingest dtype for x / weights (default bf16: halves DMA
        bytes, native bf16 MXU on all generations).  Accumulation is always f32.
    out_dtype: output dtype (default x.dtype, matching the torch module; pass
        jnp.bfloat16 to halve output writeback if the caller accepts it).
    precision: optional lax.Precision for the in-kernel dots (e.g. HIGHEST for
        exact f32 parity when compute_dtype=float32).
    """
    x_shape = x.shape
    in_size = x_shape[-1]
    out_size = weights[-1].shape[1]
    num_hidden = len(weights) - 1
    out_dtype = x.dtype if out_dtype is None else out_dtype

    x2d = x.reshape(-1, in_size)
    M = x2d.shape[0]

    # Reduced-precision ingest for x / weights (MXU inputs).
    if jnp.dtype(compute_dtype) != x2d.dtype:
        x2d = x2d.astype(compute_dtype)
    weights = [w.astype(compute_dtype) for w in weights]

    # Hidden-layer elementwise chain dtype (bf16 on v6e/v7x, f32 on v5e); the
    # final layer's bias stays f32 so the last add happens in f32 before store.
    hidden_dtype = _default_hidden_dtype(compute_dtype)
    biases = ([b.astype(hidden_dtype) for b in biases[:-1]]
              + [biases[-1].astype(jnp.float32)])

    vmem_budget, vmem_limit = _vmem_budget_and_limit()
    if tile_m is None:
        tile_m = _pick_tile_m(in_size, out_size, weights, biases,
                              x2d.dtype.itemsize, jnp.dtype(out_dtype).itemsize,
                              vmem_budget)
    tile_m = max(8, _round_up(int(tile_m), 8))
    # Keep >= 2 grid steps whenever M allows, so ("parallel",) can split rows
    # across v7x's two TensorCores and the pipeline has steps to overlap.
    if M >= 16:
        tile_m = min(tile_m, _round_up(pl.cdiv(M, 2), 8))
    else:
        tile_m = min(tile_m, _round_up(max(M, 1), 8))
    num_tiles = pl.cdiv(M, tile_m)   # ragged last block clipped by Pallas

    params = []
    in_specs = [pl.BlockSpec((tile_m, in_size), lambda i: (i, 0))]
    for w, b in zip(weights, biases):
        params.extend([w, b])
        # Constant block index -> weights/biases stay VMEM-resident across the
        # whole grid (DMA'd once).
        in_specs.append(pl.BlockSpec(w.shape, lambda i: (0, 0)))
        in_specs.append(pl.BlockSpec(b.shape, lambda i: (0, 0)))

    flops = 2 * M * sum(int(w.shape[0]) * int(w.shape[1]) for w in weights)
    bytes_accessed = (x2d.size * x2d.dtype.itemsize
                      + sum(p.size * p.dtype.itemsize for p in params)
                      + M * out_size * jnp.dtype(out_dtype).itemsize)

    out2d = pl.pallas_call(
        functools.partial(_mlp_kernel, num_hidden=num_hidden, precision=precision),
        out_shape=jax.ShapeDtypeStruct((M, out_size), out_dtype),
        grid=(num_tiles,),
        in_specs=in_specs,
        out_specs=pl.BlockSpec((tile_m, out_size), lambda i: (i, 0)),
        compiler_params=pltpu.CompilerParams(
            dimension_semantics=("parallel",),
            vmem_limit_bytes=int(vmem_limit)),
        cost_estimate=pl.CostEstimate(
            flops=flops, transcendentals=0, bytes_accessed=bytes_accessed),
    )(x2d, *params)

    return out2d.reshape(*x_shape[:-1], out_size)


def init_mlp_params(key, in_size, out_size, hidden_size, init_scale=None):
    """Parameter init mirroring nn.Linear defaults.

    PyTorch Linear: W ~ U(-1/sqrt(fan_in), 1/sqrt(fan_in)), same for bias.
    If init_scale is given, last layer W ~ N(0, init_scale), bias = 0.
    Weights are returned already transposed to (fan_in, fan_out).
    """
    dims = [in_size] + list(hidden_size) + [out_size]
    weights, biases = [], []
    for li in range(len(dims) - 1):
        fan_in, fan_out = dims[li], dims[li + 1]
        key, kw, kb = jax.random.split(key, 3)
        is_last = li == len(dims) - 2
        if is_last and init_scale is not None:
            w = init_scale * jax.random.normal(kw, (fan_in, fan_out), jnp.float32)
            b = jnp.zeros((1, fan_out), jnp.float32)
        else:
            bound = 1.0 / math.sqrt(fan_in)
            w = jax.random.uniform(kw, (fan_in, fan_out), jnp.float32, -bound, bound)
            b = jax.random.uniform(kb, (1, fan_out), jnp.float32, -bound, bound)
        weights.append(w)
        biases.append(b)
    return weights, biases


if __name__ == "__main__":
    # MLP(in_size=16, out_size=8, hidden_size=[32, 32], act=ReLU,
    #     dropout_prob=None, last_linear=True)
    in_size, out_size, hidden_size = 16, 8, [32, 32]

    key = jax.random.PRNGKey(0)
    key, kx = jax.random.split(key)
    # Leading dims exercise reshape(-1, last_dim); M=210 is not a tile multiple,
    # so the ragged-tail path is exercised too.
    x = jax.random.normal(kx, (3, 70, in_size), jnp.float32)

    weights, biases = init_mlp_params(key, in_size, out_size, hidden_size)

    # pure-JAX reference
    h = x.reshape(-1, in_size)
    for li, (w, b) in enumerate(zip(weights, biases)):
        h = jnp.dot(h, w, precision=jax.lax.Precision.HIGHEST) + b
        if li < len(weights) - 1:
            h = jnp.maximum(h, 0.0)
    ref = h.reshape(3, 70, out_size)

    # Default path: bf16 ingest, f32 accumulate, f32 output, auto tile_m
    # (generation-aware, capped to give >= 2 grid steps for M=210).
    out = mlp_forward(x, weights, biases)
    out = jax.block_until_ready(out)
    assert out.shape == ref.shape
    err_bf16 = float(jnp.max(jnp.abs(out - ref)))
    assert jnp.allclose(out, ref, atol=5e-2, rtol=5e-2), f"bf16 path max err {err_bf16}"

    # f32 ingest path with a forced small tile -> 4-step grid + ragged tail.
    out_f32 = mlp_forward(x, weights, biases, compute_dtype=jnp.float32, tile_m=64)
    out_f32 = jax.block_until_ready(out_f32)
    err_f32 = float(jnp.max(jnp.abs(out_f32 - ref)))
    assert jnp.allclose(out_f32, ref, atol=1e-3, rtol=1e-3), f"f32 path max err {err_f32}"

    # TODO(synk): Dropout (training mode) not implemented; inference-mode identity assumed.
    print("KERNEL_OK")
</pallas_src>

<mosaic_0001>
module attributes {stable_mosaic.version = 11 : i64} {
  func.func @_mlp_kernel(%arg0: i32, %arg1: memref<112x16xbf16, #tpu.memory_space<vmem>>, %arg2: memref<16x32xbf16, #tpu.memory_space<vmem>>, %arg3: memref<1x32xbf16, #tpu.memory_space<vmem>>, %arg4: memref<32x32xbf16, #tpu.memory_space<vmem>>, %arg5: memref<1x32xbf16, #tpu.memory_space<vmem>>, %arg6: memref<32x8xbf16, #tpu.memory_space<vmem>>, %arg7: memref<1x8xf32, #tpu.memory_space<vmem>>, %arg8: memref<112x8xf32, #tpu.memory_space<vmem>>) attributes {dimension_semantics = [#tpu.dimension_semantics<parallel>], iteration_bounds = array<i64: 2>, scalar_prefetch = 0 : i64, scratch_operands = 0 : i64, tpu.core_type = #tpu.core_type<tc>, window_params = [{transform_indices = @transform_0, window_bounds = array<i64: 112, 16>}, {pipeline_mode = #tpu.pipeline_mode<synchronous>, transform_indices = @transform_1, window_bounds = array<i64: 16, 32>}, {pipeline_mode = #tpu.pipeline_mode<synchronous>, transform_indices = @transform_2, window_bounds = array<i64: 1, 32>}, {pipeline_mode = #tpu.pipeline_mode<synchronous>, transform_indices = @transform_3, window_bounds = array<i64: 32, 32>}, {pipeline_mode = #tpu.pipeline_mode<synchronous>, transform_indices = @transform_4, window_bounds = array<i64: 1, 32>}, {pipeline_mode = #tpu.pipeline_mode<synchronous>, transform_indices = @transform_5, window_bounds = array<i64: 32, 8>}, {pipeline_mode = #tpu.pipeline_mode<synchronous>, transform_indices = @transform_6, window_bounds = array<i64: 1, 8>}, {transform_indices = @transform_7, window_bounds = array<i64: 112, 8>}]} {
    %c0 = arith.constant 0 : index
    %c0_0 = arith.constant 0 : index
    %0 = vector.load %arg1[%c0, %c0_0] : memref<112x16xbf16, #tpu.memory_space<vmem>>, vector<112x16xbf16>
    %c0_1 = arith.constant 0 : index
    %c0_2 = arith.constant 0 : index
    %1 = vector.load %arg2[%c0_1, %c0_2] : memref<16x32xbf16, #tpu.memory_space<vmem>>, vector<16x32xbf16>
    %c0_3 = arith.constant 0 : index
    %c0_4 = arith.constant 0 : index
    %2 = vector.load %arg3[%c0_3, %c0_4] : memref<1x32xbf16, #tpu.memory_space<vmem>>, vector<1x32xbf16>
    %cst = arith.constant dense<0.000000e+00> : vector<112x32xf32>
    %3 = tpu.matmul %0, %1, %cst {dimension_numbers = #tpu.dot_dimension_numbers<[1], [0], [0], [1], [0, 0, 1, 1], [], []>} : vector<112x16xbf16>, vector<16x32xbf16>, vector<112x32xf32> -> vector<112x32xf32>
    %4 = arith.truncf %3 : vector<112x32xf32> to vector<112x32xbf16>
    %5 = vector.broadcast %2 : vector<1x32xbf16> to vector<112x32xbf16>
    %6 = arith.addf %4, %5 : vector<112x32xbf16>
    %cst_5 = arith.constant 0.000000e+00 : bf16
    %7 = vector.broadcast %cst_5 : bf16 to vector<112x32xbf16>
    %8 = arith.maximumf %6, %7 : vector<112x32xbf16>
    %c0_6 = arith.constant 0 : index
    %c0_7 = arith.constant 0 : index
    %9 = vector.load %arg4[%c0_6, %c0_7] : memref<32x32xbf16, #tpu.memory_space<vmem>>, vector<32x32xbf16>
    %c0_8 = arith.constant 0 : index
    %c0_9 = arith.constant 0 : index
    %10 = vector.load %arg5[%c0_8, %c0_9] : memref<1x32xbf16, #tpu.memory_space<vmem>>, vector<1x32xbf16>
    %cst_10 = arith.constant dense<0.000000e+00> : vector<112x32xf32>
    %11 = tpu.matmul %8, %9, %cst_10 {dimension_numbers = #tpu.dot_dimension_numbers<[1], [0], [0], [1], [0, 0, 1, 1], [], []>} : vector<112x32xbf16>, vector<32x32xbf16>, vector<112x32xf32> -> vector<112x32xf32>
    %12 = arith.truncf %11 : vector<112x32xf32> to vector<112x32xbf16>
    %13 = vector.broadcast %10 : vector<1x32xbf16> to vector<112x32xbf16>
    %14 = arith.addf %12, %13 : vector<112x32xbf16>
    %cst_11 = arith.constant 0.000000e+00 : bf16
    %15 = vector.broadcast %cst_11 : bf16 to vector<112x32xbf16>
    %16 = arith.maximumf %14, %15 : vector<112x32xbf16>
    %c0_12 = arith.constant 0 : index
    %c0_13 = arith.constant 0 : index
    %17 = vector.load %arg6[%c0_12, %c0_13] : memref<32x8xbf16, #tpu.memory_space<vmem>>, vector<32x8xbf16>
    %c0_14 = arith.constant 0 : index
    %c0_15 = arith.constant 0 : index
    %18 = vector.load %arg7[%c0_14, %c0_15] : memref<1x8xf32, #tpu.memory_space<vmem>>, vector<1x8xf32>
    %cst_16 = arith.constant dense<0.000000e+00> : vector<112x8xf32>
    %19 = tpu.matmul %16, %17, %cst_16 {dimension_numbers = #tpu.dot_dimension_numbers<[1], [0], [0], [1], [0, 0, 1, 1], [], []>} : vector<112x32xbf16>, vector<32x8xbf16>, vector<112x8xf32> -> vector<112x8xf32>
    %20 = vector.broadcast %18 : vector<1x8xf32> to vector<112x8xf32>
    %21 = arith.addf %19, %20 : vector<112x8xf32>
    %c0_17 = arith.constant 0 : index
    %c0_18 = arith.constant 0 : index
    %22 = vector.load %arg8[%c0_17, %c0_18] : memref<112x8xf32, #tpu.memory_space<vmem>>, vector<112x8xf32>
    tpu.vector_store %arg8[%c0_17, %c0_18], %21 {strides = array<i32>} : memref<112x8xf32, #tpu.memory_space<vmem>>, vector<112x8xf32>,
    return
  }
  func.func @transform_0(%arg0: i32) -> (i32, i32) {
    %c0_i32 = arith.constant 0 : i32
    %c0_i32_0 = arith.constant 0 : i32
    return %arg0, %c0_i32 : i32, i32
  }
  func.func @transform_1(%arg0: i32) -> (i32, i32) {
    %c0_i32 = arith.constant 0 : i32
    %c0_i32_0 = arith.constant 0 : i32
    %c0_i32_1 = arith.constant 0 : i32
    return %c0_i32, %c0_i32_0 : i32, i32
  }
  func.func @transform_2(%arg0: i32) -> (i32, i32) {
    %c0_i32 = arith.constant 0 : i32
    %c0_i32_0 = arith.constant 0 : i32
    %c0_i32_1 = arith.constant 0 : i32
    return %c0_i32, %c0_i32_0 : i32, i32
  }
  func.func @transform_3(%arg0: i32) -> (i32, i32) {
    %c0_i32 = arith.constant 0 : i32
    %c0_i32_0 = arith.constant 0 : i32
    %c0_i32_1 = arith.constant 0 : i32
    return %c0_i32, %c0_i32_0 : i32, i32
  }
  func.func @transform_4(%arg0: i32) -> (i32, i32) {
    %c0_i32 = arith.constant 0 : i32
    %c0_i32_0 = arith.constant 0 : i32
    %c0_i32_1 = arith.constant 0 : i32
    return %c0_i32, %c0_i32_0 : i32, i32
  }
  func.func @transform_5(%arg0: i32) -> (i32, i32) {
    %c0_i32 = arith.constant 0 : i32
    %c0_i32_0 = arith.constant 0 : i32
    %c0_i32_1 = arith.constant 0 : i32
    return %c0_i32, %c0_i32_0 : i32, i32
  }
  func.func @transform_6(%arg0: i32) -> (i32, i32) {
    %c0_i32 = arith.constant 0 : i32
    %c0_i32_0 = arith.constant 0 : i32
    %c0_i32_1 = arith.constant 0 : i32
    return %c0_i32, %c0_i32_0 : i32, i32
  }
  func.func @transform_7(%arg0: i32) -> (i32, i32) {
    %c0_i32 = arith.constant 0 : i32
    %c0_i32_0 = arith.constant 0 : i32
    return %arg0, %c0_i32 : i32, i32
  }
}

</mosaic_0001>

<llo_original>
// kernel: tpu_custom_call.1
$region0: #{tpu_custom_call.1}
  #allocation0 [shape = 'u32[]', space=smem, size = 0x4, offset = 0x4, fixed_abs, tag = 'smem constant byte address 0x4 - core index']
  #allocation1 [shape = 'u32[72,128]{1,0:T(1,128)}', space=vmem, size = 0x9000, scoped, tag = 'internal scratch']
  %s0 = inlined_call_operand.vmem [shape: bf16[210,16], index: 0, kind: input, shape index: {}]
  %s1 = inlined_call_operand.vmem [shape: bf16[16,32], index: 1, kind: input, shape index: {}]
  %s2 = inlined_call_operand.vmem [shape: bf16[1,32], index: 2, kind: input, shape index: {}]
  %s3 = inlined_call_operand.vmem [shape: bf16[32,32], index: 3, kind: input, shape index: {}]
  %s4 = inlined_call_operand.vmem [shape: bf16[1,32], index: 4, kind: input, shape index: {}]
  %s5 = inlined_call_operand.vmem [shape: bf16[32,8], index: 5, kind: input, shape index: {}]
  %s6 = inlined_call_operand.vmem [shape: f32[1,8], index: 6, kind: input, shape index: {}]
  %s7 = inlined_call_operand.vmem [shape: f32[210,8], index: 7, kind: output, shape index: {}]
  %s8 = sld [smem:[#allocation0]]
  $region109: #{tpu_custom_call.1} parent=0
    _
  %s10 = ssub.s32 1, %s8
  %s11 = scalar_select 0, %s10, %s8
  $region1: #{tpu_custom_call.1} parent=0
    #allocation2 [shape = 'u8[114688]{0}', space=vmem, size = 0x1c000, scoped, tag = 'output window, operand 0']
    loop: start=0, step=1, limit=4
    $region2: #{tpu_custom_call.1} parent=1 // loop_pre_header
      _
    $region3: #{tpu_custom_call.1} parent=1 // loop_header
      %s13 = sphi 0, %s17
      %p14 = scmp.ge.s32.totalorder %s13, 4
      %s23 = sphi 0, %s25
      %s26 = sphi 0, %s23
      %s27 = sphi 0, %s26
      %s43 = sphi 0, %s27
      %s47 = sphi 0, %s47
      %s49 = sphi 0, %s47
      %s50 = sphi 0, %s49
      %s64 = sphi 0, %s50
      %s68 = sphi 0, %s68
      %s70 = sphi 0, %s68
      %s71 = sphi 0, %s70
      %s85 = sphi 0, %s71
      %s89 = sphi 0, %s89
      %s91 = sphi 0, %s89
      %s92 = sphi 0, %s91
      %s106 = sphi 0, %s92
      %s110 = sphi 0, %s110
      %s112 = sphi 0, %s110
      %s113 = sphi 0, %s112
      %s127 = sphi 0, %s113
      %s131 = sphi 0, %s131
      %s133 = sphi 0, %s131
      %s134 = sphi 0, %s133
      %s148 = sphi 0, %s134
      %s152 = sphi 0, %s152
      %s154 = sphi 0, %s152
      %s155 = sphi 0, %s154
      %s169 = sphi 0, %s155
      %s175 = sphi 0, %s177
      %s178 = sphi 0, %s175
      %s179 = sphi 0, %s178
      %s195 = sphi 0, %s179
    $region4: #{tpu_custom_call.1} parent=1 // loop_header_branch
      %16 = sbr.rel (%p14) target = $region8
    $region5: #{tpu_custom_call.1} parent=1 // loop_body
      %s18 = ssub.s32 %s13, 1
      %s19 = ssub.s32 %s13, 2
      %s20 = sadd.s32 %s13, 1
      %s21 = ssub.s32 %s13, %s20
      %p22 = scmp.eq.s32.totalorder %s21, 0
      %s24 = sadd.s32 %s23, 1
      %s25 = scalar_select %p22, %s23, %s24
      %p28 = pneg %p22
      %p29 = scmp.eq.s32.totalorder %s13, 1
      %p30 = por %p28, %p29
      %p31 = scmp.ne.s32.totalorder %s23, %s26
      %p32 = scmp.eq.s32.totalorder %s13, 0
      %p33 = por %p31, %p32
      %p34 = scmp.ne.s32.totalorder %s23, %s26
      %p35 = scmp.eq.s32.totalorder %s18, 1
      %p36 = por %p34, %p35
      %p37 = scmp.ne.s32.totalorder %s26, %s27
      %p38 = scmp.eq.s32.totalorder %s18, 0
      %p39 = por %p37, %p38
      %p40 = scmp.ne.s32.totalorder %s26, %s27
      %p41 = scmp.eq.s32.totalorder %s19, 1
      %p42 = por %p40, %p41
      %p44 = scmp.ne.s32.totalorder %s27, %s43
      %p45 = scmp.eq.s32.totalorder %s19, 0
      %p46 = por %p44, %p45
      %s48 = sadd.s32 %s47, 1
      %p51 = scmp.eq.s32.totalorder %s13, 1
      %p52 = scmp.ne.s32.totalorder %s47, %s49
      %p53 = scmp.eq.s32.totalorder %s13, 0
      %p54 = por %p52, %p53
      %p55 = scmp.ne.s32.totalorder %s47, %s49
      %p56 = scmp.eq.s32.totalorder %s18, 1
      %p57 = por %p55, %p56
      %p58 = scmp.ne.s32.totalorder %s49, %s50
      %p59 = scmp.eq.s32.totalorder %s18, 0
      %p60 = por %p58, %p59
      %p61 = scmp.ne.s32.totalorder %s49, %s50
      %p62 = scmp.eq.s32.totalorder %s19, 1
      %p63 = por %p61, %p62
      %p65 = scmp.ne.s32.totalorder %s50, %s64
      %p66 = scmp.eq.s32.totalorder %s19, 0
      %p67 = por %p65, %p66
      %s69 = sadd.s32 %s68, 1
      %p72 = scmp.eq.s32.totalorder %s13, 1
      %p73 = scmp.ne.s32.totalorder %s68, %s70
      %p74 = scmp.eq.s32.totalorder %s13, 0
      %p75 = por %p73, %p74
      %p76 = scmp.ne.s32.totalorder %s68, %s70
      %p77 = scmp.eq.s32.totalorder %s18, 1
      %p78 = por %p76, %p77
      %p79 = scmp.ne.s32.totalorder %s70, %s71
      %p80 = scmp.eq.s32.totalorder %s18, 0
      %p81 = por %p79, %p80
      %p82 = scmp.ne.s32.totalorder %s70, %s71
      %p83 = scmp.eq.s32.totalorder %s19, 1
      %p84 = por %p82, %p83
      %p86 = scmp.ne.s32.totalorder %s71, %s85
      %p87 = scmp.eq.s32.totalorder %s19, 0
      %p88 = por %p86, %p87
      %s90 = sadd.s32 %s89, 1
      %p93 = scmp.eq.s32.totalorder %s13, 1
      %p94 = scmp.ne.s32.totalorder %s89, %s91
      %p95 = scmp.eq.s32.totalorder %s13, 0
      %p96 = por %p94, %p95
      %p97 = scmp.ne.s32.totalorder %s89, %s91
      %p98 = scmp.eq.s32.totalorder %s18, 1
      %p99 = por %p97, %p98
      %p100 = scmp.ne.s32.totalorder %s91, %s92
      %p101 = scmp.eq.s32.totalorder %s18, 0
      %p102 = por %p100, %p101
      %p103 = scmp.ne.s32.totalorder %s91, %s92
      %p104 = scmp.eq.s32.totalorder %s19, 1
      %p105 = por %p103, %p104
      %p107 = scmp.ne.s32.totalorder %s92, %s106
      %p108 = scmp.eq.s32.totalorder %s19, 0
      %p109 = por %p107, %p108
      %s111 = sadd.s32 %s110, 1
      %p114 = scmp.eq.s32.totalorder %s13, 1
      %p115 = scmp.ne.s32.totalorder %s110, %s112
      %p116 = scmp.eq.s32.totalorder %s13, 0
      %p117 = por %p115, %p116
      %p118 = scmp.ne.s32.totalorder %s110, %s112
      %p119 = scmp.eq.s32.totalorder %s18, 1
      %p120 = por %p118, %p119
      %p121 = scmp.ne.s32.totalorder %s112, %s113
      %p122 = scmp.eq.s32.totalorder %s18, 0
      %p123 = por %p121, %p122
      %p124 = scmp.ne.s32.totalorder %s112, %s113
      %p125 = scmp.eq.s32.totalorder %s19, 1
      %p126 = por %p124, %p125
      %p128 = scmp.ne.s32.totalorder %s113, %s127
      %p129 = scmp.eq.s32.totalorder %s19, 0
      %p130 = por %p128, %p129
      %s132 = sadd.s32 %s131, 1
      %p135 = scmp.eq.s32.totalorder %s13, 1
      %p136 = scmp.ne.s32.totalorder %s131, %s133
      %p137 = scmp.eq.s32.totalorder %s13, 0
      %p138 = por %p136, %p137
      %p139 = scmp.ne.s32.totalorder %s131, %s133
      %p140 = scmp.eq.s32.totalorder %s18, 1
      %p141 = por %p139, %p140
      %p142 = scmp.ne.s32.totalorder %s133, %s134
      %p143 = scmp.eq.s32.totalorder %s18, 0
      %p144 = por %p142, %p143
      %p145 = scmp.ne.s32.totalorder %s133, %s134
      %p146 = scmp.eq.s32.totalorder %s19, 1
      %p147 = por %p145, %p146
      %p149 = scmp.ne.s32.totalorder %s134, %s148
      %p150 = scmp.eq.s32.totalorder %s19, 0
      %p151 = por %p149, %p150
      %s153 = sadd.s32 %s152, 1
      %p156 = scmp.eq.s32.totalorder %s13, 1
      %p157 = scmp.ne.s32.totalorder %s152, %s154
      %p158 = scmp.eq.s32.totalorder %s13, 0
      %p159 = por %p157, %p158
      %p160 = scmp.ne.s32.totalorder %s152, %s154
      %p161 = scmp.eq.s32.totalorder %s18, 1
      %p162 = por %p160, %p161
      %p163 = scmp.ne.s32.totalorder %s154, %s155
      %p164 = scmp.eq.s32.totalorder %s18, 0
      %p165 = por %p163, %p164
      %p166 = scmp.ne.s32.totalorder %s154, %s155
      %p167 = scmp.eq.s32.totalorder %s19, 1
      %p168 = por %p166, %p167
      %p170 = scmp.ne.s32.totalorder %s155, %s169
      %p171 = scmp.eq.s32.totalorder %s19, 0
      %p172 = por %p170, %p171
      %s173 = ssub.s32 %s13, %s20
      %p174 = scmp.eq.s32.totalorder %s173, 0
      %s176 = sadd.s32 %s175, 1
      %s177 = scalar_select %p174, %s175, %s176
      %p180 = pneg %p174
      %p181 = scmp.eq.s32.totalorder %s13, 1
      %p182 = por %p180, %p181
      %p183 = scmp.ne.s32.totalorder %s175, %s178
      %p184 = scmp.eq.s32.totalorder %s13, 0
      %p185 = por %p183, %p184
      %p186 = scmp.ne.s32.totalorder %s175, %s178
      %p187 = scmp.eq.s32.totalorder %s18, 1
      %p188 = por %p186, %p187
      %p189 = scmp.ne.s32.totalorder %s178, %s179
      %p190 = scmp.eq.s32.totalorder %s18, 0
      %p191 = por %p189, %p190
      %p192 = scmp.ne.s32.totalorder %s178, %s179
      %p193 = scmp.eq.s32.totalorder %s19, 1
      %p194 = por %p192, %p193
      %p196 = scmp.ne.s32.totalorder %s179, %s195
      %p197 = scmp.eq.s32.totalorder %s19, 0
      %p198 = por %p196, %p197
      %p199 = scmp.le.s32.totalorder 1, %s13
      %p200 = scmp.lt.s32.totalorder %s13, 3
      %p201 = pnand %p199, %p200
      %p202 = pneg %p201
      // Predicated region
      $region9: #{tpu_custom_call.1} parent=5 // pred_check
        _
      $region10: #{tpu_custom_call.1} parent=5 // pred_check_branch
        %204 = sbr.rel (%p201) target = $region12
      $region11: #{tpu_custom_call.1} parent=5 // pred_region
        %s205 = ssub.s32 %s13, 1
        // Predicated region
        $region13: #{tpu_custom_call.1} parent=11 // pred_check
          %p206 = pneg %p60
        $region14: #{tpu_custom_call.1} parent=11 // pred_check_branch
          %208 = sbr.rel (%p206) target = $region16
        $region15: #{tpu_custom_call.1} parent=11 // pred_region
          _
        $region16: #{tpu_custom_call.1} parent=11 // pred_fallthru
          _
        // Predicated region
        $region17: #{tpu_custom_call.1} parent=11 // pred_check
          %p209 = pneg %p81
        $region18: #{tpu_custom_call.1} parent=11 // pred_check_branch
          %211 = sbr.rel (%p209) target = $region20
        $region19: #{tpu_custom_call.1} parent=11 // pred_region
          _
        $region20: #{tpu_custom_call.1} parent=11 // pred_fallthru
          _
        // Predicated region
        $region21: #{tpu_custom_call.1} parent=11 // pred_check
          %p212 = pneg %p102
        $region22: #{tpu_custom_call.1} parent=11 // pred_check_branch
          %214 = sbr.rel (%p212) target = $region24
        $region23: #{tpu_custom_call.1} parent=11 // pred_region
          _
        $region24: #{tpu_custom_call.1} parent=11 // pred_fallthru
          _
        // Predicated region
        $region25: #{tpu_custom_call.1} parent=11 // pred_check
          %p215 = pneg %p123
        $region26: #{tpu_custom_call.1} parent=11 // pred_check_branch
          %217 = sbr.rel (%p215) target = $region28
        $region27: #{tpu_custom_call.1} parent=11 // pred_region
          _
        $region28: #{tpu_custom_call.1} parent=11 // pred_fallthru
          _
        // Predicated region
        $region29: #{tpu_custom_call.1} parent=11 // pred_check
          %p218 = pneg %p144
        $region30: #{tpu_custom_call.1} parent=11 // pred_check_branch
          %220 = sbr.rel (%p218) target = $region32
        $region31: #{tpu_custom_call.1} parent=11 // pred_region
          _
        $region32: #{tpu_custom_call.1} parent=11 // pred_fallthru
          _
        // Predicated region
        $region33: #{tpu_custom_call.1} parent=11 // pred_check
          %p221 = pneg %p165
        $region34: #{tpu_custom_call.1} parent=11 // pred_check_branch
          %223 = sbr.rel (%p221) target = $region36
        $region35: #{tpu_custom_call.1} parent=11 // pred_region
          _
        $region36: #{tpu_custom_call.1} parent=11 // pred_fallthru
          _
      $region12: #{tpu_custom_call.1} parent=5 // pred_fallthru
        _
      %p224 = scmp.lt.s32.totalorder %s13, 2
      // Predicated region
      $region37: #{tpu_custom_call.1} parent=5 // pred_check
        %p225 = pneg %p224
      $region38: #{tpu_custom_call.1} parent=5 // pred_check_branch
        %227 = sbr.rel (%p225) target = $region40
      $region39: #{tpu_custom_call.1} parent=5 // pred_region
        // Predicated region
        $region41: #{tpu_custom_call.1} parent=39 // pred_check
          %p228 = pneg %p33
        $region42: #{tpu_custom_call.1} parent=39 // pred_check_branch
          %230 = sbr.rel (%p228) target = $region44
        $region43: #{tpu_custom_call.1} parent=39 // pred_region
          %s231 = smul.u32 14, %s13
          %s232 = ssub.s32 27, %s231
          %p233 = scmp.lt.s32.totalorder %s232, 14
          %s234 = scalar_select %p233, %s232, 14
          %s235 = smul.u32 4, %s234
          %p236 = scmp.lt.s32.totalorder %s231, 26
          %s237 = scalar_select %p236, %s231, 26
          %s238 = smul.addr %s237, 4
          %s239 = scalar_lea.vmem %s0, %s238
          %s240 = smul.u32 14, %s13
          %s241 = ssub.s32 27, %s240
          %p242 = scmp.lt.s32.totalorder %s241, 14
          %s243 = scalar_select %p242, %s241, 14
          %s244 = smul.u32 4, %s243
        $region44: #{tpu_custom_call.1} parent=39 // pred_fallthru
          _
      $region40: #{tpu_custom_call.1} parent=5 // pred_fallthru
        _
      %p245 = scmp.le.s32.totalorder 1, %s13
      %p246 = scmp.lt.s32.totalorder %s13, 3
      %p247 = pnand %p245, %p246
      %p248 = pneg %p247
      // Predicated region
      $region45: #{tpu_custom_call.1} parent=5 // pred_check
        _
      $region46: #{tpu_custom_call.1} parent=5 // pred_check_branch
        %250 = sbr.rel (%p247) target = $region48
      $region47: #{tpu_custom_call.1} parent=5 // pred_region
        %s251 = ssub.s32 %s13, 1
        %s252 = smul.u32 14, %s18
        %s253 = ssub.s32 27, %s252
        %p254 = scmp.lt.s32.totalorder %s253, 14
        %s255 = scalar_select %p254, %s253, 14
        %s256 = smul.u32 4, %s255
        %p257 = scmp.lt.s32.totalorder %s252, 26
        %s258 = scalar_select %p257, %s252, 26
        %s259 = smul.addr %s258, 4
        %s260 = scalar_lea.vmem %s0, %s259
        %p261 = pneg %p39
        %p262 = pneg %p36
        %p263 = pneg %p60
        %p264 = pneg %p57
        %p265 = pneg %p81
        %p266 = pneg %p78
        %p267 = pneg %p102
        %p268 = pneg %p99
        %p269 = pneg %p123
        %p270 = pneg %p120
        %p271 = pneg %p144
        %p272 = pneg %p141
        %p273 = pneg %p165
        %p274 = pneg %p162
        %p275 = pneg %p191
        %p276 = pneg %p188
        %s277 = sand.u32 %s178, 1
        %s278 = sand.u32 %s178, 1
        %s279 = smul.addr %s278, 112
        %s280 = scalar_lea.vmem [#allocation2], %s279
        %s281 = smul.u32 14, %s18
        %s282 = ssub.s32 27, %s281
        %p283 = scmp.lt.s32.totalorder %s282, 14
        %s284 = scalar_select %p283, %s282, 14
        %s285 = smul.u32 4, %s284
        %p286 = scmp.lt.s32.totalorder %s281, 26
        %s287 = scalar_select %p286, %s281, 26
        %s288 = smul.addr %s287, 4
        %s289 = scalar_lea.vmem %s0, %s288
        %s290 = smul.u32 14, %s18
        %s291 = ssub.s32 27, %s290
        %p292 = scmp.lt.s32.totalorder %s291, 14
        %s293 = scalar_select %p292, %s291, 14
        %s294 = smul.u32 4, %s293
        %s295 = smul.u32 14, %s18
        %s296 = ssub.s32 27, %s295
        %p297 = scmp.lt.s32.totalorder %s296, 14
        %s298 = scalar_select %p297, %s296, 14
        %s299 = smul.u32 8, %s298
        %v301 = vld [vmem:[%s289] sm:$0xf]
        %v302 = vld [vmem:[%s289 + $0x4] sm:$0xf]
        %v303 = vld [vmem:[%s289 + $0x8] sm:$0xf]
        %v304 = vld [vmem:[%s289 + $0xc] sm:$0xf]
        %v305 = vld [vmem:[%s289 + $0x10] sm:$0xf]
        %v306 = vld [vmem:[%s289 + $0x14] sm:$0xf]
        %v307 = vld [vmem:[%s289 + $0x18] sm:$0xf]
        %v308 = vld [vmem:[%s289 + $0x1c] sm:$0xf]
        %v309 = vld [vmem:[%s289 + $0x20] sm:$0xf]
        %v310 = vld [vmem:[%s289 + $0x24] sm:$0xf]
        %v311 = vld [vmem:[%s289 + $0x28] sm:$0xf]
        %v312 = vld [vmem:[%s289 + $0x2c] sm:$0xf]
        %v313 = vld [vmem:[%s289 + $0x30] sm:$0xf]
        %v314 = vld [vmem:[%s289 + $0x34] sm:$0xf]
        %v315 = vld [vmem:[%s1] sm:$0xf]
        %v316 = vld [vmem:[%s1 + $0x4] sm:$0xf]
        %v317 = vld [vmem:[%s2] sm:$0x1]
        %v332 = vunpack.c.l.b16 %v301
        %v333 = vunpack.c.l.b16 %v302
        %v334 = vunpack.c.l.b16 %v303
        %v335 = vunpack.c.l.b16 %v304
        %v336 = vunpack.c.l.b16 %v305
        %v337 = vunpack.c.l.b16 %v306
        %v338 = vunpack.c.l.b16 %v307
        %v339 = vunpack.c.l.b16 %v308
        %v340 = vunpack.c.l.b16 %v309
        %v341 = vunpack.c.l.b16 %v310
        %v342 = vunpack.c.l.b16 %v311
        %v343 = vunpack.c.l.b16 %v312
        %v344 = vunpack.c.l.b16 %v313
        %v345 = vunpack.c.l.b16 %v314
        %v346 = vpack.c.b16 %v333, %v332
        %v347 = vpack.c.b16 %v335, %v334
        %v348 = vpack.c.b16 %v337, %v336
        %v349 = vpack.c.b16 %v339, %v338
        %v350 = vpack.c.b16 %v341, %v340
        %v351 = vpack.c.b16 %v343, %v342
        %v352 = vpack.c.b16 %v345, %v344
        %v355 = vunpack.c.l.b16 %v315
        %v356 = vunpack.c.l.b16 %v316
        %v357 = vpack.c.b16 %v356, %v355
        %vm359 = vcmask 130048
        %v361 = vsel %vm359, %v346, 0
        %v364 = vsel %vm359, %v347, 0
        %v367 = vsel %vm359, %v348, 0
        %v370 = vsel %vm359, %v349, 0
        %v373 = vsel %vm359, %v350, 0
        %v376 = vsel %vm359, %v351, 0
        %v379 = vsel %vm359, %v352, 0
        %381 = vmatpush.bf16.msra.mxu0 0
        %382 = vmatpush.bf16.msra.mxu0 0
        %383 = vmatpush.bf16.msra.mxu0 0
        %384 = vmatpush.bf16.msra.mxu0 0
        %385 = vmatpush.bf16.msra.mxu0 0
        %386 = vmatpush.bf16.msra.mxu0 0
        %387 = vmatpush.bf16.msra.mxu0 0
        %388 = vmatpush.bf16.msra.mxu0 %v357
        %389 = vmatmul.bf16.gmra.mxu0 %v361
        %v390 = vpop.f32.mrf.mxu0
        %v391 = vadd.f32 0.0, %v390
        %v392 = vpop.f32.mrf.mxu0
        %v393 = vadd.f32 0.0, %v392
        %394 = vmatmul.bf16.gmra.mxu0 %v364
        %v395 = vpop.f32.mrf.mxu0
        %v396 = vadd.f32 0.0, %v395
        %v397 = vpop.f32.mrf.mxu0
        %v398 = vadd.f32 0.0, %v397
        %399 = vmatmul.bf16.gmra.mxu0 %v367
        %v400 = vpop.f32.mrf.mxu0
        %v401 = vadd.f32 0.0, %v400
        %v402 = vpop.f32.mrf.mxu0
        %v403 = vadd.f32 0.0, %v402
        %404 = vmatmul.bf16.gmra.mxu0 %v370
        %v405 = vpop.f32.mrf.mxu0
        %v406 = vadd.f32 0.0, %v405
        %v407 = vpop.f32.mrf.mxu0
        %v408 = vadd.f32 0.0, %v407
        %409 = vmatmul.bf16.gmra.mxu0 %v373
        %v410 = vpop.f32.mrf.mxu0
        %v411 = vadd.f32 0.0, %v410
        %v412 = vpop.f32.mrf.mxu0
        %v413 = vadd.f32 0.0, %v412
        %414 = vmatmul.bf16.gmra.mxu0 %v376
        %v415 = vpop.f32.mrf.mxu0
        %v416 = vadd.f32 0.0, %v415
        %v417 = vpop.f32.mrf.mxu0
        %v418 = vadd.f32 0.0, %v417
        %419 = vmatmul.bf16.gmra.mxu0 %v379
        %v420 = vpop.f32.mrf.mxu0
        %v421 = vadd.f32 0.0, %v420
        %v422 = vpop.f32.mrf.mxu0
        %v423 = vadd.f32 0.0, %v422
        %424 = vdwg.mxu0
        %v425 = vpack.c.bf16 %v391, %v391
        %v426 = vpack.c.bf16 %v393, %v393
        %v427 = vpack.c.bf16 %v396, %v396
        %v428 = vpack.c.bf16 %v398, %v398
        %v429 = vpack.c.bf16 %v401, %v401
        %v430 = vpack.c.bf16 %v403, %v403
        %v431 = vpack.c.bf16 %v406, %v406
        %v432 = vpack.c.bf16 %v408, %v408
        %v433 = vpack.c.bf16 %v411, %v411
        %v434 = vpack.c.bf16 %v413, %v413
        %v435 = vpack.c.bf16 %v416, %v416
        %v436 = vpack.c.bf16 %v418, %v418
        %v437 = vpack.c.bf16 %v421, %v421
        %v438 = vpack.c.bf16 %v423, %v423
        %v440 = vpack.i.b16 %v317, %v317
        %v442 = vperm.slane %v440, 0
        %v443 = vunpack.c.l.bf16 %v425
        %v444 = vunpack.c.l.bf16 %v426
        %v445 = vunpack.c.l.bf16 %v427
        %v446 = vunpack.c.l.bf16 %v428
        %v447 = vunpack.c.l.bf16 %v429
        %v448 = vunpack.c.l.bf16 %v430
        %v449 = vunpack.c.l.bf16 %v431
        %v450 = vunpack.c.l.bf16 %v432
        %v451 = vunpack.c.l.bf16 %v433
        %v452 = vunpack.c.l.bf16 %v434
        %v453 = vunpack.c.l.bf16 %v435
        %v454 = vunpack.c.l.bf16 %v436
        %v455 = vunpack.c.l.bf16 %v437
        %v456 = vunpack.c.l.bf16 %v438
        %v457 = vunpack.c.l.bf16 %v442
        %v458 = vadd.f32 %v443, %v457
        %v459 = vadd.f32 %v444, %v457
        %v460 = vadd.f32 %v445, %v457
        %v461 = vadd.f32 %v446, %v457
        %v462 = vadd.f32 %v447, %v457
        %v463 = vadd.f32 %v448, %v457
        %v464 = vadd.f32 %v449, %v457
        %v465 = vadd.f32 %v450, %v457
        %v466 = vadd.f32 %v451, %v457
        %v467 = vadd.f32 %v452, %v457
        %v468 = vadd.f32 %v453, %v457
        %v469 = vadd.f32 %v454, %v457
        %v470 = vadd.f32 %v455, %v457
        %v471 = vadd.f32 %v456, %v457
        %v472 = vpack.c.bf16 %v458, %v458
        %v473 = vpack.c.bf16 %v459, %v459
        %v474 = vpack.c.bf16 %v460, %v460
        %v475 = vpack.c.bf16 %v461, %v461
        %v476 = vpack.c.bf16 %v462, %v462
        %v477 = vpack.c.bf16 %v463, %v463
        %v478 = vpack.c.bf16 %v464, %v464
        %v479 = vpack.c.bf16 %v465, %v465
        %v480 = vpack.c.bf16 %v466, %v466
        %v481 = vpack.c.bf16 %v467, %v467
        %v482 = vpack.c.bf16 %v468, %v468
        %v483 = vpack.c.bf16 %v469, %v469
        %v484 = vpack.c.bf16 %v470, %v470
        %v485 = vpack.c.bf16 %v471, %v471
        %v486 = vunpack.c.l.bf16 %v472
        %v487 = vunpack.c.l.bf16 %v473
        %v488 = vunpack.c.l.bf16 %v474
        %v489 = vunpack.c.l.bf16 %v475
        %v490 = vunpack.c.l.bf16 %v476
        %v491 = vunpack.c.l.bf16 %v477
        %v492 = vunpack.c.l.bf16 %v478
        %v493 = vunpack.c.l.bf16 %v479
        %v494 = vunpack.c.l.bf16 %v480
        %v495 = vunpack.c.l.bf16 %v481
        %v496 = vunpack.c.l.bf16 %v482
        %v497 = vunpack.c.l.bf16 %v483
        %v498 = vunpack.c.l.bf16 %v484
        %v499 = vunpack.c.l.bf16 %v485
        %v500 = vmax.f32 %v486, 0.0
        %v501 = vmax.f32 %v487, 0.0
        %v502 = vmax.f32 %v488, 0.0
        %v503 = vmax.f32 %v489, 0.0
        %v504 = vmax.f32 %v490, 0.0
        %v505 = vmax.f32 %v491, 0.0
        %v506 = vmax.f32 %v492, 0.0
        %v507 = vmax.f32 %v493, 0.0
        %v508 = vmax.f32 %v494, 0.0
        %v509 = vmax.f32 %v495, 0.0
        %v510 = vmax.f32 %v496, 0.0
        %v511 = vmax.f32 %v497, 0.0
        %v512 = vmax.f32 %v498, 0.0
        %v513 = vmax.f32 %v499, 0.0
        %v514 = vpack.c.bf16 %v501, %v500
        %v515 = vpack.c.bf16 %v503, %v502
        %v516 = vpack.c.bf16 %v505, %v504
        %v517 = vpack.c.bf16 %v507, %v506
        %v518 = vpack.c.bf16 %v509, %v508
        %v519 = vpack.c.bf16 %v511, %v510
        %v520 = vpack.c.bf16 %v513, %v512
        %v521 = vld [vmem:[%s3] sm:$0xf]
        %v522 = vld [vmem:[%s3 + $0x4] sm:$0xf]
        %v523 = vld [vmem:[%s3 + $0x8] sm:$0xf]
        %v524 = vld [vmem:[%s3 + $0xc] sm:$0xf]
        %v525 = vld [vmem:[%s4] sm:$0x1]
        %v530 = vunpack.c.l.b16 %v521
        %v531 = vunpack.c.l.b16 %v522
        %v532 = vunpack.c.l.b16 %v523
        %v533 = vunpack.c.l.b16 %v524
        %v534 = vpack.c.b16 %v531, %v530
        %v535 = vpack.c.b16 %v533, %v532
        %vm538 = vcmask 261120
        %v540 = vsel %vm538, %v514, 0
        %v543 = vsel %vm538, %v515, 0
        %v546 = vsel %vm538, %v516, 0
        %v549 = vsel %vm538, %v517, 0
        %v552 = vsel %vm538, %v518, 0
        %v555 = vsel %vm538, %v519, 0
        %v558 = vsel %vm538, %v520, 0
        %560 = vmatpush.bf16.msra.mxu0 0
        %561 = vmatpush.bf16.msra.mxu0 0
        %562 = vmatpush.bf16.msra.mxu0 0
        %563 = vmatpush.bf16.msra.mxu0 0
        %564 = vmatpush.bf16.msra.mxu0 0
        %565 = vmatpush.bf16.msra.mxu0 0
        %566 = vmatpush.bf16.msra.mxu0 %v535
        %567 = vmatpush.bf16.msra.mxu0 %v534
        %568 = vmatmul.bf16.gmra.mxu0 %v540
        %v569 = vpop.f32.mrf.mxu0
        %v570 = vadd.f32 0.0, %v569
        %v571 = vpop.f32.mrf.mxu0
        %v572 = vadd.f32 0.0, %v571
        %573 = vmatmul.bf16.gmra.mxu0 %v543
        %v574 = vpop.f32.mrf.mxu0
        %v575 = vadd.f32 0.0, %v574
        %v576 = vpop.f32.mrf.mxu0
        %v577 = vadd.f32 0.0, %v576
        %578 = vmatmul.bf16.gmra.mxu0 %v546
        %v579 = vpop.f32.mrf.mxu0
        %v580 = vadd.f32 0.0, %v579
        %v581 = vpop.f32.mrf.mxu0
        %v582 = vadd.f32 0.0, %v581
        %583 = vmatmul.bf16.gmra.mxu0 %v549
        %v584 = vpop.f32.mrf.mxu0
        %v585 = vadd.f32 0.0, %v584
        %v586 = vpop.f32.mrf.mxu0
        %v587 = vadd.f32 0.0, %v586
        %588 = vmatmul.bf16.gmra.mxu0 %v552
        %v589 = vpop.f32.mrf.mxu0
        %v590 = vadd.f32 0.0, %v589
        %v591 = vpop.f32.mrf.mxu0
        %v592 = vadd.f32 0.0, %v591
        %593 = vmatmul.bf16.gmra.mxu0 %v555
        %v594 = vpop.f32.mrf.mxu0
        %v595 = vadd.f32 0.0, %v594
        %v596 = vpop.f32.mrf.mxu0
        %v597 = vadd.f32 0.0, %v596
        %598 = vmatmul.bf16.gmra.mxu0 %v558
        %v599 = vpop.f32.mrf.mxu0
        %v600 = vadd.f32 0.0, %v599
        %v601 = vpop.f32.mrf.mxu0
        %v602 = vadd.f32 0.0, %v601
        %603 = vdwg.mxu0
        %v604 = vpack.c.bf16 %v570, %v570
        %v605 = vpack.c.bf16 %v572, %v572
        %v606 = vpack.c.bf16 %v575, %v575
        %v607 = vpack.c.bf16 %v577, %v577
        %v608 = vpack.c.bf16 %v580, %v580
        %v609 = vpack.c.bf16 %v582, %v582
        %v610 = vpack.c.bf16 %v585, %v585
        %v611 = vpack.c.bf16 %v587, %v587
        %v612 = vpack.c.bf16 %v590, %v590
        %v613 = vpack.c.bf16 %v592, %v592
        %v614 = vpack.c.bf16 %v595, %v595
        %v615 = vpack.c.bf16 %v597, %v597
        %v616 = vpack.c.bf16 %v600, %v600
        %v617 = vpack.c.bf16 %v602, %v602
        %v619 = vpack.i.b16 %v525, %v525
        %v621 = vperm.slane %v619, 0
        %v622 = vunpack.c.l.bf16 %v604
        %v623 = vunpack.c.l.bf16 %v605
        %v624 = vunpack.c.l.bf16 %v606
        %v625 = vunpack.c.l.bf16 %v607
        %v626 = vunpack.c.l.bf16 %v608
        %v627 = vunpack.c.l.bf16 %v609
        %v628 = vunpack.c.l.bf16 %v610
        %v629 = vunpack.c.l.bf16 %v611
        %v630 = vunpack.c.l.bf16 %v612
        %v631 = vunpack.c.l.bf16 %v613
        %v632 = vunpack.c.l.bf16 %v614
        %v633 = vunpack.c.l.bf16 %v615
        %v634 = vunpack.c.l.bf16 %v616
        %v635 = vunpack.c.l.bf16 %v617
        %v636 = vunpack.c.l.bf16 %v621
        %v637 = vadd.f32 %v622, %v636
        %v638 = vadd.f32 %v623, %v636
        %v639 = vadd.f32 %v624, %v636
        %v640 = vadd.f32 %v625, %v636
        %v641 = vadd.f32 %v626, %v636
        %v642 = vadd.f32 %v627, %v636
        %v643 = vadd.f32 %v628, %v636
        %v644 = vadd.f32 %v629, %v636
        %v645 = vadd.f32 %v630, %v636
        %v646 = vadd.f32 %v631, %v636
        %v647 = vadd.f32 %v632, %v636
        %v648 = vadd.f32 %v633, %v636
        %v649 = vadd.f32 %v634, %v636
        %v650 = vadd.f32 %v635, %v636
        %v651 = vpack.c.bf16 %v637, %v637
        %v652 = vpack.c.bf16 %v638, %v638
        %v653 = vpack.c.bf16 %v639, %v639
        %v654 = vpack.c.bf16 %v640, %v640
        %v655 = vpack.c.bf16 %v641, %v641
        %v656 = vpack.c.bf16 %v642, %v642
        %v657 = vpack.c.bf16 %v643, %v643
        %v658 = vpack.c.bf16 %v644, %v644
        %v659 = vpack.c.bf16 %v645, %v645
        %v660 = vpack.c.bf16 %v646, %v646
        %v661 = vpack.c.bf16 %v647, %v647
        %v662 = vpack.c.bf16 %v648, %v648
        %v663 = vpack.c.bf16 %v649, %v649
        %v664 = vpack.c.bf16 %v650, %v650
        %v665 = vunpack.c.l.bf16 %v651
        %v666 = vunpack.c.l.bf16 %v652
        %v667 = vunpack.c.l.bf16 %v653
        %v668 = vunpack.c.l.bf16 %v654
        %v669 = vunpack.c.l.bf16 %v655
        %v670 = vunpack.c.l.bf16 %v656
        %v671 = vunpack.c.l.bf16 %v657
        %v672 = vunpack.c.l.bf16 %v658
        %v673 = vunpack.c.l.bf16 %v659
        %v674 = vunpack.c.l.bf16 %v660
        %v675 = vunpack.c.l.bf16 %v661
        %v676 = vunpack.c.l.bf16 %v662
        %v677 = vunpack.c.l.bf16 %v663
        %v678 = vunpack.c.l.bf16 %v664
        %v679 = vmax.f32 %v665, 0.0
        %v680 = vmax.f32 %v666, 0.0
        %v681 = vmax.f32 %v667, 0.0
        %v682 = vmax.f32 %v668, 0.0
        %v683 = vmax.f32 %v669, 0.0
        %v684 = vmax.f32 %v670, 0.0
        %v685 = vmax.f32 %v671, 0.0
        %v686 = vmax.f32 %v672, 0.0
        %v687 = vmax.f32 %v673, 0.0
        %v688 = vmax.f32 %v674, 0.0
        %v689 = vmax.f32 %v675, 0.0
        %v690 = vmax.f32 %v676, 0.0
        %v691 = vmax.f32 %v677, 0.0
        %v692 = vmax.f32 %v678, 0.0
        %v693 = vpack.c.bf16 %v680, %v679
        %v694 = vpack.c.bf16 %v682, %v681
        %v695 = vpack.c.bf16 %v684, %v683
        %v696 = vpack.c.bf16 %v686, %v685
        %v697 = vpack.c.bf16 %v688, %v687
        %v698 = vpack.c.bf16 %v690, %v689
        %v699 = vpack.c.bf16 %v692, %v691
        %v700 = vld [vmem:[%s5] sm:$0xf]
        %v701 = vld [vmem:[%s5 + $0x4] sm:$0xf]
        %v702 = vld [vmem:[%s5 + $0x8] sm:$0xf]
        %v703 = vld [vmem:[%s5 + $0xc] sm:$0xf]
        %v704 = vld [vmem:[%s6] sm:$0x1]
        %v706 = vperm.slane %v704, 0
        %v712 = vunpack.c.l.b16 %v700
        %v713 = vunpack.c.l.b16 %v701
        %v714 = vunpack.c.l.b16 %v702
        %v715 = vunpack.c.l.b16 %v703
        %v716 = vpack.c.b16 %v713, %v712
        %v717 = vpack.c.b16 %v715, %v714
        %v721 = vsel %vm538, %v693, 0
        %v724 = vsel %vm538, %v694, 0
        %v727 = vsel %vm538, %v695, 0
        %v730 = vsel %vm538, %v696, 0
        %v733 = vsel %vm538, %v697, 0
        %v736 = vsel %vm538, %v698, 0
        %v739 = vsel %vm538, %v699, 0
        %741 = vmatpush.bf16.msra.mxu0 0
        %742 = vmatpush.bf16.msra.mxu0 0
        %743 = vmatpush.bf16.msra.mxu0 0
        %744 = vmatpush.bf16.msra.mxu0 0
        %745 = vmatpush.bf16.msra.mxu0 0
        %746 = vmatpush.bf16.msra.mxu0 0
        %747 = vmatpush.bf16.msra.mxu0 %v717
        %748 = vmatpush.bf16.msra.mxu0 %v716
        %749 = vmatmul.bf16.gmra.mxu0 %v721
        %v750 = vpop.f32.mrf.mxu0
        %v751 = vadd.f32 %v706, %v750
        %v752 = vpop.f32.mrf.mxu0
        %v753 = vadd.f32 %v706, %v752
        %754 = vmatmul.bf16.gmra.mxu0 %v724
        %v755 = vpop.f32.mrf.mxu0
        %v756 = vadd.f32 %v706, %v755
        %v757 = vpop.f32.mrf.mxu0
        %v758 = vadd.f32 %v706, %v757
        %759 = vmatmul.bf16.gmra.mxu0 %v727
        %v760 = vpop.f32.mrf.mxu0
        %v761 = vadd.f32 %v706, %v760
        %v762 = vpop.f32.mrf.mxu0
        %v763 = vadd.f32 %v706, %v762
        %764 = vmatmul.bf16.gmra.mxu0 %v730
        %v765 = vpop.f32.mrf.mxu0
        %v766 = vadd.f32 %v706, %v765
        %v767 = vpop.f32.mrf.mxu0
        %v768 = vadd.f32 %v706, %v767
        %769 = vmatmul.bf16.gmra.mxu0 %v733
        %v770 = vpop.f32.mrf.mxu0
        %v771 = vadd.f32 %v706, %v770
        %v772 = vpop.f32.mrf.mxu0
        %v773 = vadd.f32 %v706, %v772
        %774 = vmatmul.bf16.gmra.mxu0 %v736
        %v775 = vpop.f32.mrf.mxu0
        %v776 = vadd.f32 %v706, %v775
        %v777 = vpop.f32.mrf.mxu0
        %v778 = vadd.f32 %v706, %v777
        %779 = vmatmul.bf16.gmra.mxu0 %v739
        %v780 = vpop.f32.mrf.mxu0
        %v781 = vadd.f32 %v706, %v780
        %v782 = vpop.f32.mrf.mxu0
        %v783 = vadd.f32 %v706, %v782
        %784 = vdwg.mxu0
        %vm785 = vcmask 64512
        %786 = vst.msk [vmem:[%s280] sm:$0xff] %vm785, %v751
        %787 = vst.msk [vmem:[%s280 + $0x8] sm:$0xff] %vm785, %v753
        %788 = vst.msk [vmem:[%s280 + $0x10] sm:$0xff] %vm785, %v756
        %789 = vst.msk [vmem:[%s280 + $0x18] sm:$0xff] %vm785, %v758
        %790 = vst.msk [vmem:[%s280 + $0x20] sm:$0xff] %vm785, %v761
        %791 = vst.msk [vmem:[%s280 + $0x28] sm:$0xff] %vm785, %v763
        %792 = vst.msk [vmem:[%s280 + $0x30] sm:$0xff] %vm785, %v766
        %793 = vst.msk [vmem:[%s280 + $0x38] sm:$0xff] %vm785, %v768
        %794 = vst.msk [vmem:[%s280 + $0x40] sm:$0xff] %vm785, %v771
        %795 = vst.msk [vmem:[%s280 + $0x48] sm:$0xff] %vm785, %v773
        %796 = vst.msk [vmem:[%s280 + $0x50] sm:$0xff] %vm785, %v776
        %797 = vst.msk [vmem:[%s280 + $0x58] sm:$0xff] %vm785, %v778
        %798 = vst.msk [vmem:[%s280 + $0x60] sm:$0xff] %vm785, %v781
        %799 = vst.msk [vmem:[%s280 + $0x68] sm:$0xff] %vm785, %v783
        %s800 = sand.u32 %s178, 1
        %s801 = sand.u32 %s178, 1
        %s802 = smul.addr %s801, 112
        %s803 = scalar_lea.vmem [#allocation2], %s802
        // Predicated region
        $region49: #{tpu_custom_call.1} parent=47 // pred_check
          %p804 = pneg %p188
        $region50: #{tpu_custom_call.1} parent=47 // pred_check_branch
          %806 = sbr.rel (%p804) target = $region52
        $region51: #{tpu_custom_call.1} parent=47 // pred_region
          %s807 = smul.u32 14, %s18
          %s808 = ssub.s32 27, %s807
          %p809 = scmp.lt.s32.totalorder %s808, 14
          %s810 = scalar_select %p809, %s808, 14
          %s811 = smul.u32 8, %s810
          %p812 = scmp.ne.s32.totalorder 0, %s811
          %s813 = smul.addr %s807, 8
          %s814 = scalar_lea.vmem %s7, %s813
          // Predicated region
          $region53: #{tpu_custom_call.1} parent=51 // pred_check
            %p815 = pneg %p812
          $region54: #{tpu_custom_call.1} parent=51 // pred_check_branch
            %817 = sbr.rel (%p815) target = $region56
          $region55: #{tpu_custom_call.1} parent=51 // pred_region
            // Predicated region
            $region57: #{tpu_custom_call.1} parent=55 // pred_check
              _
            $region58: #{tpu_custom_call.1} parent=55 // pred_check_branch
              %819 = sbr.rel (0) target = $region60
            $region59: #{tpu_custom_call.1} parent=55 // pred_region
              // Predicated region
              $region79: #{tpu_custom_call.1} parent=59 // pred_check
                _
              $region80: #{tpu_custom_call.1} parent=59 // pred_check_branch
                %896 = sbr.rel (0) target = $region82
              $region81: #{tpu_custom_call.1} parent=59 // pred_region
                %s897 = sdiv.u32.pop %s810, 14
                %s898 = srem.u32.pop %s810, 14
                // While loop
                $region83: #{tpu_custom_call.1} parent=81 // loop_pre_header
                  _
                $region84: #{tpu_custom_call.1} parent=81 // loop_header
                  %s900 = sphi 0, %s902
                  %p901 = scmp.ge.s32.totalorder %s900, %s897
                  %s905 = sphi 0, %s938
                  %s906 = sphi %s803, %s941
                  %s907 = sphi %s814, %s942
                $region85: #{tpu_custom_call.1} parent=81 // loop_header_branch
                  %904 = sbr.rel (%p901) target = $region89
                $region86: #{tpu_custom_call.1} parent=81 // loop_body
                  %v908 = vld [vmem:[%s906] sm:$0xff]
                  %909 = vst [vmem:[%s907] sm:$0xff] %v908
                  %v910 = vld [vmem:[%s906 + $0x8] sm:$0xff]
                  %911 = vst [vmem:[%s907 + $0x8] sm:$0xff] %v910
                  %v912 = vld [vmem:[%s906 + $0x10] sm:$0xff]
                  %913 = vst [vmem:[%s907 + $0x10] sm:$0xff] %v912
                  %v914 = vld [vmem:[%s906 + $0x18] sm:$0xff]
                  %915 = vst [vmem:[%s907 + $0x18] sm:$0xff] %v914
                  %v916 = vld [vmem:[%s906 + $0x20] sm:$0xff]
                  %917 = vst [vmem:[%s907 + $0x20] sm:$0xff] %v916
                  %v918 = vld [vmem:[%s906 + $0x28] sm:$0xff]
                  %919 = vst [vmem:[%s907 + $0x28] sm:$0xff] %v918
                  %v920 = vld [vmem:[%s906 + $0x30] sm:$0xff]
                  %921 = vst [vmem:[%s907 + $0x30] sm:$0xff] %v920
                  %v922 = vld [vmem:[%s906 + $0x38] sm:$0xff]
                  %923 = vst [vmem:[%s907 + $0x38] sm:$0xff] %v922
                  %v924 = vld [vmem:[%s906 + $0x40] sm:$0xff]
                  %925 = vst [vmem:[%s907 + $0x40] sm:$0xff] %v924
                  %v926 = vld [vmem:[%s906 + $0x48] sm:$0xff]
                  %927 = vst [vmem:[%s907 + $0x48] sm:$0xff] %v926
                  %v928 = vld [vmem:[%s906 + $0x50] sm:$0xff]
                  %929 = vst [vmem:[%s907 + $0x50] sm:$0xff] %v928
                  %v930 = vld [vmem:[%s906 + $0x58] sm:$0xff]
                  %931 = vst [vmem:[%s907 + $0x58] sm:$0xff] %v930
                  %v932 = vld [vmem:[%s906 + $0x60] sm:$0xff]
                  %933 = vst [vmem:[%s907 + $0x60] sm:$0xff] %v932
                  %v934 = vld [vmem:[%s906 + $0x68] sm:$0xff]
                  %935 = vst [vmem:[%s907 + $0x68] sm:$0xff] %v934
                  %s936 = sadd.s32 1, %s905
                  %p937 = scmp.ge.s32.totalorder %s936, %s897
                  %s938 = scalar_select %p937, 0, %s936
                  %s939 = smul.u32 %s938, 112
                  %s940 = smul.u32 %s938, 112
                  %s941 = scalar_lea.vmem %s803, %s939 [#allocation2]
                  %s942 = scalar_lea.vmem %s814, %s940
                $region87: #{tpu_custom_call.1} parent=81 // loop_footer
                  %s902 = sadd.s32 %s900, 1
                $region88: #{tpu_custom_call.1} parent=81 // loop_footer_branch
                  %899 = sbr.rel target = $region84
                $region89: #{tpu_custom_call.1} parent=81 // loop_exit
                  _
                %s943 = sdiv.u32.pop %s810, 14
                %s944 = srem.u32.pop %s810, 14
                %s945 = smul.u32 %s943, 14
                %s946 = smul.u32 8, %s945
                %s947 = scalar_lea.vmem %s803, %s946 [#allocation2]
                %s948 = smul.u32 8, %s945
                %s949 = scalar_lea.vmem %s814, %s948
                // While loop
                $region90: #{tpu_custom_call.1} parent=81 // loop_pre_header
                  _
                $region91: #{tpu_custom_call.1} parent=81 // loop_header
                  %s951 = sphi 0, %s953
                  %p952 = scmp.ge.s32.totalorder %s951, %s944
                  %s956 = sphi 0, %s963
                  %s957 = sphi %s947, %s966
                  %s958 = sphi %s949, %s967
                $region92: #{tpu_custom_call.1} parent=81 // loop_header_branch
                  %955 = sbr.rel (%p952) target = $region96
                $region93: #{tpu_custom_call.1} parent=81 // loop_body
                  %v959 = vld [vmem:[%s957] sm:$0xff]
                  %960 = vst [vmem:[%s958] sm:$0xff] %v959
                  %s961 = sadd.s32 1, %s956
                  %p962 = scmp.ge.s32.totalorder %s961, %s944
                  %s963 = scalar_select %p962, 0, %s961
                  %s964 = smul.u32 %s963, 8
                  %s965 = smul.u32 %s963, 8
                  %s966 = scalar_lea.vmem %s947, %s964 [#allocation2]
                  %s967 = scalar_lea.vmem %s949, %s965
                $region94: #{tpu_custom_call.1} parent=81 // loop_footer
                  %s953 = sadd.s32 %s951, 1
                $region95: #{tpu_custom_call.1} parent=81 // loop_footer_branch
                  %950 = sbr.rel target = $region91
                $region96: #{tpu_custom_call.1} parent=81 // loop_exit
                  _
              $region82: #{tpu_custom_call.1} parent=59 // pred_fallthru
                _
              // Predicated region
              $region97: #{tpu_custom_call.1} parent=59 // pred_check
                _
              $region98: #{tpu_custom_call.1} parent=59 // pred_check_branch
                %969 = sbr.rel target = $region100
              $region99: #{tpu_custom_call.1} parent=59 // pred_region
                _
              $region100: #{tpu_custom_call.1} parent=59 // pred_fallthru
                _
            $region60: #{tpu_custom_call.1} parent=55 // pred_fallthru
              _
            // Predicated region
            $region61: #{tpu_custom_call.1} parent=55 // pred_check
              _
            $region62: #{tpu_custom_call.1} parent=55 // pred_check_branch
              %821 = sbr.rel target = $region64
            $region63: #{tpu_custom_call.1} parent=55 // pred_region
              %s823 = ssub.s32 256, 1
              %s824 = sdiv.u32.pop %s810, 14
              %s825 = srem.u32.pop %s810, 14
              // While loop
              $region65: #{tpu_custom_call.1} parent=63 // loop_pre_header
                _
              $region66: #{tpu_custom_call.1} parent=63 // loop_header
                %s827 = sphi 0, %s829
                %p828 = scmp.ge.s32.totalorder %s827, %s824
                %s832 = sphi 0, %s865
                %s833 = sphi %s803, %s868
                %s834 = sphi %s814, %s869
              $region67: #{tpu_custom_call.1} parent=63 // loop_header_branch
                %831 = sbr.rel (%p828) target = $region71
              $region68: #{tpu_custom_call.1} parent=63 // loop_body
                %v835 = vld [vmem:[%s833] sm:%s823]
                %836 = vst [vmem:[%s834] sm:%s823] %v835
                %v837 = vld [vmem:[%s833 + $0x8] sm:%s823]
                %838 = vst [vmem:[%s834 + $0x8] sm:%s823] %v837
                %v839 = vld [vmem:[%s833 + $0x10] sm:%s823]
                %840 = vst [vmem:[%s834 + $0x10] sm:%s823] %v839
                %v841 = vld [vmem:[%s833 + $0x18] sm:%s823]
                %842 = vst [vmem:[%s834 + $0x18] sm:%s823] %v841
                %v843 = vld [vmem:[%s833 + $0x20] sm:%s823]
                %844 = vst [vmem:[%s834 + $0x20] sm:%s823] %v843
                %v845 = vld [vmem:[%s833 + $0x28] sm:%s823]
                %846 = vst [vmem:[%s834 + $0x28] sm:%s823] %v845
                %v847 = vld [vmem:[%s833 + $0x30] sm:%s823]
                %848 = vst [vmem:[%s834 + $0x30] sm:%s823] %v847
                %v849 = vld [vmem:[%s833 + $0x38] sm:%s823]
                %850 = vst [vmem:[%s834 + $0x38] sm:%s823] %v849
                %v851 = vld [vmem:[%s833 + $0x40] sm:%s823]
                %852 = vst [vmem:[%s834 + $0x40] sm:%s823] %v851
                %v853 = vld [vmem:[%s833 + $0x48] sm:%s823]
                %854 = vst [vmem:[%s834 + $0x48] sm:%s823] %v853
                %v855 = vld [vmem:[%s833 + $0x50] sm:%s823]
                %856 = vst [vmem:[%s834 + $0x50] sm:%s823] %v855
                %v857 = vld [vmem:[%s833 + $0x58] sm:%s823]
                %858 = vst [vmem:[%s834 + $0x58] sm:%s823] %v857
                %v859 = vld [vmem:[%s833 + $0x60] sm:%s823]
                %860 = vst [vmem:[%s834 + $0x60] sm:%s823] %v859
                %v861 = vld [vmem:[%s833 + $0x68] sm:%s823]
                %862 = vst [vmem:[%s834 + $0x68] sm:%s823] %v861
                %s863 = sadd.s32 1, %s832
                %p864 = scmp.ge.s32.totalorder %s863, %s824
                %s865 = scalar_select %p864, 0, %s863
                %s866 = smul.u32 %s865, 112
                %s867 = smul.u32 %s865, 112
                %s868 = scalar_lea.vmem %s803, %s866 [#allocation2]
                %s869 = scalar_lea.vmem %s814, %s867
              $region69: #{tpu_custom_call.1} parent=63 // loop_footer
                %s829 = sadd.s32 %s827, 1
              $region70: #{tpu_custom_call.1} parent=63 // loop_footer_branch
                %826 = sbr.rel target = $region66
              $region71: #{tpu_custom_call.1} parent=63 // loop_exit
                _
              %s870 = sdiv.u32.pop %s810, 14
              %s871 = srem.u32.pop %s810, 14
              %s872 = smul.u32 %s870, 14
              %s873 = smul.u32 8, %s872
              %s874 = scalar_lea.vmem %s803, %s873 [#allocation2]
              %s875 = smul.u32 8, %s872
              %s876 = scalar_lea.vmem %s814, %s875
              // While loop
              $region72: #{tpu_custom_call.1} parent=63 // loop_pre_header
                _
              $region73: #{tpu_custom_call.1} parent=63 // loop_header
                %s878 = sphi 0, %s880
                %p879 = scmp.ge.s32.totalorder %s878, %s871
                %s883 = sphi 0, %s890
                %s884 = sphi %s874, %s893
                %s885 = sphi %s876, %s894
              $region74: #{tpu_custom_call.1} parent=63 // loop_header_branch
                %882 = sbr.rel (%p879) target = $region78
              $region75: #{tpu_custom_call.1} parent=63 // loop_body
                %v886 = vld [vmem:[%s884] sm:%s823]
                %887 = vst [vmem:[%s885] sm:%s823] %v886
                %s888 = sadd.s32 1, %s883
                %p889 = scmp.ge.s32.totalorder %s888, %s871
                %s890 = scalar_select %p889, 0, %s888
                %s891 = smul.u32 %s890, 8
                %s892 = smul.u32 %s890, 8
                %s893 = scalar_lea.vmem %s874, %s891 [#allocation2]
                %s894 = scalar_lea.vmem %s876, %s892
              $region76: #{tpu_custom_call.1} parent=63 // loop_footer
                %s880 = sadd.s32 %s878, 1
              $region77: #{tpu_custom_call.1} parent=63 // loop_footer_branch
                %877 = sbr.rel target = $region73
              $region78: #{tpu_custom_call.1} parent=63 // loop_exit
                _
            $region64: #{tpu_custom_call.1} parent=55 // pred_fallthru
              _
          $region56: #{tpu_custom_call.1} parent=51 // pred_fallthru
            _
          %970 = vnop
        $region52: #{tpu_custom_call.1} parent=47 // pred_fallthru
          _
      $region48: #{tpu_custom_call.1} parent=5 // pred_fallthru
        _
      %p971 = scmp.le.s32.totalorder 2, %s13
      // Predicated region
      $region101: #{tpu_custom_call.1} parent=5 // pred_check
        %p972 = pneg %p971
      $region102: #{tpu_custom_call.1} parent=5 // pred_check_branch
        %974 = sbr.rel (%p972) target = $region104
      $region103: #{tpu_custom_call.1} parent=5 // pred_region
        %s975 = ssub.s32 %s13, 2
        // Predicated region
        $region105: #{tpu_custom_call.1} parent=103 // pred_check
          %p976 = pneg %p194
        $region106: #{tpu_custom_call.1} parent=103 // pred_check_branch
          %978 = sbr.rel (%p976) target = $region108
        $region107: #{tpu_custom_call.1} parent=103 // pred_region
          %s979 = sand.u32 %s179, 1
          %s980 = sand.u32 %s179, 1
          %s981 = smul.addr %s980, 112
          %s982 = scalar_lea.vmem [#allocation2], %s981
        $region108: #{tpu_custom_call.1} parent=103 // pred_fallthru
          _
      $region104: #{tpu_custom_call.1} parent=5 // pred_fallthru
        _
    $region6: #{tpu_custom_call.1} parent=1 // loop_footer
      %s17 = sadd.s32 1, %s13
    $region7: #{tpu_custom_call.1} parent=1 // loop_footer_branch
      %12 = sbr.rel target = $region3
    $region8: #{tpu_custom_call.1} parent=1 // loop_exit
      _

</llo_original>
